<compile_context>
chip_gen: v5e
topology: v5e:2x2
jax: 0.10.0
libtpu: 0.0.40
codegen_flags: <defaults>
</compile_context>

<pallas_src>
import functools

import jax
import jax.numpy as jnp
from jax.experimental import pallas as pl
from jax.experimental.pallas import tpu as pltpu


# ---------------------------------------------------------------------------
# small helpers
# ---------------------------------------------------------------------------
def _round_up(x, m):
    return ((x + m - 1) // m) * m


def _pad2(x, rows, cols):
    r, c = x.shape
    if r == rows and c == cols:
        return x
    return jnp.pad(x, ((0, rows - r), (0, cols - c)))


# ---------------------------------------------------------------------------
# Pallas kernels
# ---------------------------------------------------------------------------
def _mm_kernel(a_ref, w_ref, sh_ref, o_ref, acc_ref, *, relu):
    """Tiled matmul with K-reduction accumulator and fused shift[+ReLU] epilogue."""
    @pl.when(pl.program_id(2) == 0)
    def _():
        acc_ref[...] = jnp.zeros_like(acc_ref)

    acc_ref[...] += jnp.dot(a_ref[...], w_ref[...],
                            preferred_element_type=jnp.float32)

    @pl.when(pl.program_id(2) == pl.num_programs(2) - 1)
    def _():
        y = acc_ref[...] + sh_ref[...]
        if relu:
            y = jnp.maximum(y, 0.0)
        o_ref[...] = y.astype(o_ref.dtype)


def _mm_res_kernel(a_ref, w_ref, sh_ref, r_ref, o_ref, acc_ref, *, relu):
    """Same as _mm_kernel but the epilogue also adds a (tm, tn)-tiled residual."""
    @pl.when(pl.program_id(2) == 0)
    def _():
        acc_ref[...] = jnp.zeros_like(acc_ref)

    acc_ref[...] += jnp.dot(a_ref[...], w_ref[...],
                            preferred_element_type=jnp.float32)

    @pl.when(pl.program_id(2) == pl.num_programs(2) - 1)
    def _():
        y = acc_ref[...] + sh_ref[...] + r_ref[...].astype(jnp.float32)
        if relu:
            y = jnp.maximum(y, 0.0)
        o_ref[...] = y.astype(o_ref.dtype)


def _maxpool9_kernel(p0, p1, p2, p3, p4, p5, p6, p7, p8, o_ref):
    """Elementwise max tree over the 9 shifted views (pure VPU, no XLU reduce)."""
    m = jnp.maximum(p0[...], p1[...])
    m = jnp.maximum(m, p2[...])
    m = jnp.maximum(m, p3[...])
    m = jnp.maximum(m, p4[...])
    m = jnp.maximum(m, p5[...])
    m = jnp.maximum(m, p6[...])
    m = jnp.maximum(m, p7[...])
    m = jnp.maximum(m, p8[...])
    o_ref[...] = m


def _head_kernel(x_ref, w1_ref, b1_ref, w2_ref, b2_ref, o_ref):
    """Fused GAP + Linear(512,128)+ReLU + Linear(128,ncls_pad)."""
    g = jnp.mean(x_ref[...].astype(jnp.float32), axis=1)            # (B, 512)
    h = jnp.dot(g.astype(jnp.bfloat16), w1_ref[...],
                preferred_element_type=jnp.float32) + b1_ref[...]
    h = jnp.maximum(h, 0.0)
    y = jnp.dot(h.astype(jnp.bfloat16), w2_ref[...],
                preferred_element_type=jnp.float32) + b2_ref[...]
    o_ref[...] = y


# ---------------------------------------------------------------------------
# Tiled fused matmul wrapper
# ---------------------------------------------------------------------------
_MM_PARAMS = pltpu.CompilerParams(
    dimension_semantics=("parallel", "parallel", "arbitrary"))


def _pick_tk(K):
    kr = _round_up(K, 128)
    for cand in (512, 384, 256, 128):
        if kr % cand == 0:
            return cand, kr
    return 128, kr


def matmul_shift(a, w, shift, relu=False, residual=None, out_dtype=jnp.bfloat16):
    """out = act((a @ w) + shift [+ residual]); bf16 operands, f32 accumulation."""
    M, K = a.shape
    _, N = w.shape
    tm = 256 if M >= 256 else _round_up(M, 8)
    tn = min(256, _round_up(N, 128))
    tk, Kp = _pick_tk(K)
    Mp = _round_up(M, tm)
    Np = _round_up(N, tn)

    a_p = _pad2(a.astype(jnp.bfloat16), Mp, Kp)
    w_p = _pad2(w.astype(jnp.bfloat16), Kp, Np)
    sh_p = _pad2(shift.reshape(1, N).astype(jnp.float32), 1, Np)

    inputs = [a_p, w_p, sh_p]
    in_specs = [
        pl.BlockSpec((tm, tk), lambda i, j, k: (i, k)),
        pl.BlockSpec((tk, tn), lambda i, j, k: (k, j)),
        pl.BlockSpec((1, tn), lambda i, j, k: (0, j)),
    ]
    if residual is not None:
        inputs.append(_pad2(residual.reshape(M, N).astype(jnp.bfloat16), Mp, Np))
        in_specs.append(pl.BlockSpec((tm, tn), lambda i, j, k: (i, j)))
        kern = functools.partial(_mm_res_kernel, relu=relu)
    else:
        kern = functools.partial(_mm_kernel, relu=relu)

    out = pl.pallas_call(
        kern,
        out_shape=jax.ShapeDtypeStruct((Mp, Np), out_dtype),
        grid=(Mp // tm, Np // tn, Kp // tk),
        in_specs=in_specs,
        out_specs=pl.BlockSpec((tm, tn), lambda i, j, k: (i, j)),
        scratch_shapes=[pltpu.VMEM((tm, tn), jnp.float32)],
        compiler_params=_MM_PARAMS,
    )(*inputs)
    return out[:M, :N]


# ---------------------------------------------------------------------------
# Conv / pool glue (bf16 im2col in plain JAX, math in Pallas)
# ---------------------------------------------------------------------------
def im2col(x, kh, kw, stride, pad):
    """x: (N, H, W, C) bf16 -> patches (N, Ho, Wo, kh*kw, C)."""
    # TODO(synk): a fully implicit-GEMM conv (taps as a K-grid axis reading shifted
    # windows) would avoid this patch materialization entirely; here we keep im2col
    # but in bf16 so the HBM amplification is halved vs f32.
    x = jnp.pad(x, ((0, 0), (pad, pad), (pad, pad), (0, 0)))
    N, H, W, C = x.shape
    Ho = (H - kh) // stride + 1
    Wo = (W - kw) // stride + 1
    cols = []
    for i in range(kh):
        for j in range(kw):
            cols.append(x[:, i:i + stride * Ho:stride, j:j + stride * Wo:stride, :])
    p = jnp.stack(cols, axis=3)  # (N, Ho, Wo, kh*kw, C)
    return p, (N, Ho, Wo)


def conv_bn(x, w, scale, shift, stride, pad, relu, residual=None):
    """Conv2d (no bias) + eval-mode BN [+ residual] [+ ReLU]; BN scale folded into W."""
    Cout, Cin, kh, kw = w.shape
    p, (N, Ho, Wo) = im2col(x, kh, kw, stride, pad)
    a = p.reshape(N * Ho * Wo, kh * kw * Cin)
    wm = jnp.transpose(w, (2, 3, 1, 0)).reshape(kh * kw * Cin, Cout)
    wm = wm * scale[None, :]                      # fold BN scale (f32) into weights
    r = None if residual is None else residual.reshape(N * Ho * Wo, Cout)
    y = matmul_shift(a, wm, shift, relu=relu, residual=r)
    return y.reshape(N, Ho, Wo, Cout)


def maxpool_3x3_s2_p1(x):
    N, H, W, C = x.shape
    xp = jnp.pad(x, ((0, 0), (1, 1), (1, 1), (0, 0)),
                 constant_values=float("-inf"))
    Hp, Wp = H + 2, W + 2
    Ho = (Hp - 3) // 2 + 1
    Wo = (Wp - 3) // 2 + 1
    M = N * Ho * Wo
    tm = 256 if M >= 256 else _round_up(M, 8)
    Mp = _round_up(M, tm)
    views = []
    for i in range(3):
        for j in range(3):
            v = xp[:, i:i + 2 * Ho:2, j:j + 2 * Wo:2, :].reshape(M, C)
            views.append(_pad2(v, Mp, C))
    spec = pl.BlockSpec((tm, C), lambda i: (i, 0))
    y = pl.pallas_call(
        _maxpool9_kernel,
        out_shape=jax.ShapeDtypeStruct((Mp, C), x.dtype),
        grid=(Mp // tm,),
        in_specs=[spec] * 9,
        out_specs=spec,
        compiler_params=pltpu.CompilerParams(dimension_semantics=("parallel",)),
    )(*views)
    return y[:M].reshape(N, Ho, Wo, C)


def classifier_head(x, fc1_w, fc1_b, fc2_w, fc2_b):
    """AdaptiveAvgPool2d((1,1)) + Flatten + Linear+ReLU+(Dropout eval)+Linear, fused."""
    N, H, W, C = x.shape                          # C == 512
    HW = H * W
    Bp = _round_up(N, 8)
    ncls = fc2_w.shape[1]
    nclsp = _round_up(max(ncls, 128), 128)        # pad tiny logits dim to lane width
    H1 = fc1_w.shape[1]                           # 128

    xr = jnp.pad(x.reshape(N, HW, C).astype(jnp.bfloat16),
                 ((0, Bp - N), (0, 0), (0, 0)))
    w1 = fc1_w.astype(jnp.bfloat16)
    b1 = fc1_b.reshape(1, -1).astype(jnp.float32)
    w2 = jnp.pad(fc2_w, ((0, 0), (0, nclsp - ncls))).astype(jnp.bfloat16)
    b2 = jnp.pad(fc2_b, (0, nclsp - ncls)).reshape(1, -1).astype(jnp.float32)

    out = pl.pallas_call(
        _head_kernel,
        out_shape=jax.ShapeDtypeStruct((Bp, nclsp), jnp.float32),
        grid=(1,),
        in_specs=[
            pl.BlockSpec((Bp, HW, C), lambda i: (0, 0, 0)),
            pl.BlockSpec((C, H1), lambda i: (0, 0)),
            pl.BlockSpec((1, H1), lambda i: (0, 0)),
            pl.BlockSpec((H1, nclsp), lambda i: (0, 0)),
            pl.BlockSpec((1, nclsp), lambda i: (0, 0)),
        ],
        out_specs=pl.BlockSpec((Bp, nclsp), lambda i: (0, 0)),
    )(xr, w1, b1, w2, b2)
    return out[:N, :ncls]


# ---------------------------------------------------------------------------
# Deterministic (synthetic) parameter initialization for ResNet-34
# ---------------------------------------------------------------------------
def _bn_scale_shift(gamma, beta, mean, var, eps=1e-5):
    scale = gamma / jnp.sqrt(var + eps)
    shift = beta - mean * scale
    return scale.astype(jnp.float32), shift.astype(jnp.float32)


def _init_conv(key, cout, cin, kh, kw):
    std = (2.0 / (cin * kh * kw)) ** 0.5
    return std * jax.random.normal(key, (cout, cin, kh, kw), jnp.float32)


def _init_bn(key, c):
    k1, k2, k3, k4 = jax.random.split(key, 4)
    gamma = 1.0 + 0.1 * jax.random.normal(k1, (c,), jnp.float32)
    beta = 0.1 * jax.random.normal(k2, (c,), jnp.float32)
    mean = 0.1 * jax.random.normal(k3, (c,), jnp.float32)
    var = 0.5 + jax.random.uniform(k4, (c,), jnp.float32)
    return _bn_scale_shift(gamma, beta, mean, var)


def _init_basic_block(key, cin, cout, stride):
    ks = jax.random.split(key, 6)
    p = {
        "stride": stride,
        "conv1": _init_conv(ks[0], cout, cin, 3, 3),
        "bn1": _init_bn(ks[1], cout),
        "conv2": _init_conv(ks[2], cout, cout, 3, 3),
        "bn2": _init_bn(ks[3], cout),
    }
    if stride != 1 or cin != cout:
        p["down_conv"] = _init_conv(ks[4], cout, cin, 1, 1)
        p["down_bn"] = _init_bn(ks[5], cout)
    return p


def init_finetuned_resnet34(key, num_classes=4):
    # TODO(synk): ImageNet-pretrained weights are not available in-script; deterministic
    # synthetic init preserves the exact architecture / forward semantics.
    stages = [(3, 64, 1), (4, 128, 2), (6, 256, 2), (3, 512, 2)]  # ResNet-34
    params = {}
    key, k1, k2 = jax.random.split(key, 3)
    params["conv1"] = _init_conv(k1, 64, 3, 7, 7)
    params["bn1"] = _init_bn(k2, 64)
    blocks = []
    cin = 64
    for (n_blocks, cout, stride) in stages:
        for b in range(n_blocks):
            key, kb = jax.random.split(key)
            blocks.append(_init_basic_block(kb, cin, cout, stride if b == 0 else 1))
            cin = cout
    params["blocks"] = blocks
    key, kw1, kb1, kw2, kb2 = jax.random.split(key, 5)
    params["fc1_w"] = (1.0 / 512.0 ** 0.5) * jax.random.normal(kw1, (512, 128), jnp.float32)
    params["fc1_b"] = 0.01 * jax.random.normal(kb1, (128,), jnp.float32)
    params["fc2_w"] = (1.0 / 128.0 ** 0.5) * jax.random.normal(kw2, (128, num_classes), jnp.float32)
    params["fc2_b"] = 0.01 * jax.random.normal(kb2, (num_classes,), jnp.float32)
    return params


# ---------------------------------------------------------------------------
# Forward pass (matches FineTunedResNet34.forward in eval mode)
# ---------------------------------------------------------------------------
def basic_block_forward(x, p):
    stride = p["stride"]
    out = conv_bn(x, p["conv1"], *p["bn1"], stride=stride, pad=1, relu=True)
    if "down_conv" in p:
        identity = conv_bn(x, p["down_conv"], *p["down_bn"],
                           stride=stride, pad=0, relu=False)
    else:
        identity = x
    # conv2 + bn2 + residual add + ReLU fused in one tiled Pallas matmul epilogue
    return conv_bn(out, p["conv2"], *p["bn2"], stride=1, pad=1,
                   relu=True, residual=identity)


def finetuned_resnet34_forward(params, x_nchw):
    x = jnp.transpose(x_nchw, (0, 2, 3, 1)).astype(jnp.bfloat16)   # NCHW -> NHWC, bf16
    # stem: conv 7x7/2 + BN + ReLU, maxpool 3x3/2
    x = conv_bn(x, params["conv1"], *params["bn1"], stride=2, pad=3, relu=True)
    x = maxpool_3x3_s2_p1(x)
    # residual stages
    for p in params["blocks"]:
        x = basic_block_forward(x, p)
    # fused GAP + Linear(512,128)+ReLU + Linear(128,num_classes)
    # TODO(synk): nn.Dropout(0.3) is identity in eval mode; intentionally omitted.
    return classifier_head(x, params["fc1_w"], params["fc1_b"],
                           params["fc2_w"], params["fc2_b"])


# ---------------------------------------------------------------------------
if __name__ == "__main__":
    key = jax.random.PRNGKey(0)
    kparam, kx = jax.random.split(key)
    params = init_finetuned_resnet34(kparam, num_classes=4)
    # small input consistent with the module: NCHW, 3 channels
    x = jax.random.normal(kx, (2, 3, 32, 32), jnp.float32)
    logits = finetuned_resnet34_forward(params, x)
    logits = jax.block_until_ready(logits)
    assert logits.shape == (2, 4), logits.shape
    assert bool(jnp.all(jnp.isfinite(logits)))
    print("KERNEL_OK")
</pallas_src>

<mosaic_0001>
module attributes {stable_mosaic.version = 11 : i64} {
  func.func @_mm_kernel(%arg0: i32, %arg1: i32, %arg2: i32, %arg3: memref<256x256xbf16, #tpu.memory_space<vmem>>, %arg4: memref<256x128xbf16, #tpu.memory_space<vmem>>, %arg5: memref<1x128xf32, #tpu.memory_space<vmem>>, %arg6: memref<256x128xbf16, #tpu.memory_space<vmem>>, %arg7: memref<256x128xf32, #tpu.memory_space<vmem>>) attributes {dimension_semantics = [#tpu.dimension_semantics<parallel>, #tpu.dimension_semantics<parallel>, #tpu.dimension_semantics<arbitrary>], iteration_bounds = array<i64: 2, 1, 1>, scalar_prefetch = 0 : i64, scratch_operands = 1 : i64, tpu.core_type = #tpu.core_type<tc>, window_params = [{transform_indices = @transform_0, window_bounds = array<i64: 256, 256>}, {transform_indices = @transform_1, window_bounds = array<i64: 256, 128>}, {transform_indices = @transform_2, window_bounds = array<i64: 1, 128>}, {transform_indices = @transform_3, window_bounds = array<i64: 256, 128>}]} {
    %c0_i32 = arith.constant 0 : i32
    %0 = arith.cmpi eq, %arg2, %c0_i32 : i32
    %1 = arith.extui %0 : i1 to i32
    %c0_i32_0 = arith.constant 0 : i32
    %2 = arith.cmpi ne, %1, %c0_i32_0 : i32
    scf.if %2 {
      %cst_10 = arith.constant 0.000000e+00 : f32
      %12 = vector.broadcast %cst_10 : f32 to vector<256x128xf32>
      %c0_11 = arith.constant 0 : index
      %c0_12 = arith.constant 0 : index
      %13 = vector.load %arg7[%c0_11, %c0_12] : memref<256x128xf32, #tpu.memory_space<vmem>>, vector<256x128xf32>
      tpu.vector_store %arg7[%c0_11, %c0_12], %12 {strides = array<i32>} : memref<256x128xf32, #tpu.memory_space<vmem>>, vector<256x128xf32>,
    } else {
    }
    %c0 = arith.constant 0 : index
    %c0_1 = arith.constant 0 : index
    %3 = vector.load %arg7[%c0, %c0_1] : memref<256x128xf32, #tpu.memory_space<vmem>>, vector<256x128xf32>
    %c0_2 = arith.constant 0 : index
    %c0_3 = arith.constant 0 : index
    %4 = vector.load %arg3[%c0_2, %c0_3] : memref<256x256xbf16, #tpu.memory_space<vmem>>, vector<256x256xbf16>
    %c0_4 = arith.constant 0 : index
    %c0_5 = arith.constant 0 : index
    %5 = vector.load %arg4[%c0_4, %c0_5] : memref<256x128xbf16, #tpu.memory_space<vmem>>, vector<256x128xbf16>
    %cst = arith.constant dense<0.000000e+00> : vector<256x128xf32>
    %6 = tpu.matmul %4, %5, %cst {dimension_numbers = #tpu.dot_dimension_numbers<[1], [0], [0], [1], [0, 0, 1, 1], [], []>} : vector<256x256xbf16>, vector<256x128xbf16>, vector<256x128xf32> -> vector<256x128xf32>
    %7 = arith.addf %3, %6 : vector<256x128xf32>
    %c0_6 = arith.constant 0 : index
    %c0_7 = arith.constant 0 : index
    %8 = vector.load %arg7[%c0_6, %c0_7] : memref<256x128xf32, #tpu.memory_space<vmem>>, vector<256x128xf32>
    tpu.vector_store %arg7[%c0_6, %c0_7], %7 {strides = array<i32>} : memref<256x128xf32, #tpu.memory_space<vmem>>, vector<256x128xf32>,
    %c0_i32_8 = arith.constant 0 : i32
    %9 = arith.cmpi eq, %arg2, %c0_i32_8 : i32
    %10 = arith.extui %9 : i1 to i32
    %c0_i32_9 = arith.constant 0 : i32
    %11 = arith.cmpi ne, %10, %c0_i32_9 : i32
    scf.if %11 {
      %c0_10 = arith.constant 0 : index
      %c0_11 = arith.constant 0 : index
      %12 = vector.load %arg7[%c0_10, %c0_11] : memref<256x128xf32, #tpu.memory_space<vmem>>, vector<256x128xf32>
      %c0_12 = arith.constant 0 : index
      %c0_13 = arith.constant 0 : index
      %13 = vector.load %arg5[%c0_12, %c0_13] : memref<1x128xf32, #tpu.memory_space<vmem>>, vector<1x128xf32>
      %14 = vector.broadcast %13 : vector<1x128xf32> to vector<256x128xf32>
      %15 = arith.addf %12, %14 : vector<256x128xf32>
      %cst_14 = arith.constant 0.000000e+00 : f32
      %16 = vector.broadcast %cst_14 : f32 to vector<256x128xf32>
      %17 = arith.maximumf %15, %16 : vector<256x128xf32>
      %18 = arith.truncf %17 : vector<256x128xf32> to vector<256x128xbf16>
      %c0_15 = arith.constant 0 : index
      %c0_16 = arith.constant 0 : index
      %19 = vector.load %arg6[%c0_15, %c0_16] : memref<256x128xbf16, #tpu.memory_space<vmem>>, vector<256x128xbf16>
      tpu.vector_store %arg6[%c0_15, %c0_16], %18 {strides = array<i32>} : memref<256x128xbf16, #tpu.memory_space<vmem>>, vector<256x128xbf16>,
    } else {
    }
    return
  }
  func.func @transform_0(%arg0: i32, %arg1: i32, %arg2: i32) -> (i32, i32) {
    %c0_i32 = arith.constant 0 : i32
    return %arg0, %arg2 : i32, i32
  }
  func.func @transform_1(%arg0: i32, %arg1: i32, %arg2: i32) -> (i32, i32) {
    %c0_i32 = arith.constant 0 : i32
    return %arg2, %arg1 : i32, i32
  }
  func.func @transform_2(%arg0: i32, %arg1: i32, %arg2: i32) -> (i32, i32) {
    %c0_i32 = arith.constant 0 : i32
    %c0_i32_0 = arith.constant 0 : i32
    return %c0_i32, %arg1 : i32, i32
  }
  func.func @transform_3(%arg0: i32, %arg1: i32, %arg2: i32) -> (i32, i32) {
    %c0_i32 = arith.constant 0 : i32
    return %arg0, %arg1 : i32, i32
  }
}

</mosaic_0001>

<llo_original>
// kernel: tpu_custom_call.1
$region0: #{tpu_custom_call.1}
  #allocation0 [shape = 'u32[]', space=smem, size = 0x4, offset = 0x4, fixed_abs, tag = 'smem constant byte address 0x4 - core index']
  #allocation1 [shape = 'u32[72,128]{1,0:T(1,128)}', space=vmem, size = 0x9000, scoped, tag = 'internal scratch']
  #allocation2 [shape = 'f32[256,128]{1,0:T(8,128)}', space=vmem, size = 0x20000, scoped, tag = 'scratch operand']
  %s0 = inlined_call_operand.hbm [shape: bf16[512,256], index: 0, kind: input, shape index: {}]
  %s1 = inlined_call_operand.hbm [shape: bf16[256,128], index: 1, kind: input, shape index: {}]
  %s2 = inlined_call_operand.vmem [shape: f32[1,128], index: 2, kind: input, shape index: {}]
  %s3 = inlined_call_operand.hbm [shape: bf16[512,128], index: 3, kind: output, shape index: {}]
  %s4 = sld [smem:[#allocation0]]
  $region61: #{tpu_custom_call.1} parent=0
    _
  %s6 = ssub.s32 1, %s4
  %s7 = scalar_select 0, %s6, %s4
  $region1: #{tpu_custom_call.1} parent=0
    #allocation3 [shape = 'u8[262144]{0}', space=vmem, size = 0x40000, scoped, tag = 'input window, operand 0']
    #allocation4 [shape = 's32[2]{0}', space=sflag, size = 0x8, scoped, tag = 'scoped memory for tpu_custom_call.1']
    #allocation5 [shape = 's32[2]{0}', space=sflag, size = 0x8, scoped, tag = 'scoped memory for tpu_custom_call.1']
    #allocation6 [shape = 'u8[65536]{0}', space=vmem, size = 0x10000, scoped, tag = 'input window, operand 1, single buffered']
    #allocation7 [shape = 's32[1]{0}', space=sflag, size = 0x4, scoped, tag = 'scoped memory for tpu_custom_call.1']
    #allocation8 [shape = 'u8[131072]{0}', space=vmem, size = 0x20000, scoped, tag = 'output window, operand 0']
    %8 = vsyncpa [#allocation4], 0
    %s9 = scalar_lea.sflag [#allocation4], 1
    %10 = vsyncpa %s9, 0
    %11 = vsyncpa [#allocation7], 0
    %12 = vsyncpa [#allocation5], 0
    %s13 = scalar_lea.sflag [#allocation5], 1
    %14 = vsyncpa %s13, 0
    loop: start=0, step=1, limit=4
    $region2: #{tpu_custom_call.1} parent=1 // loop_pre_header
      _
    $region3: #{tpu_custom_call.1} parent=1 // loop_header
      %s16 = sphi 0, %s20
      %p17 = scmp.ge.s32.totalorder %s16, 4
      %s23 = sphi 0, %s42
      %s24 = sphi 0, %s38
      %s25 = sphi 0, %s34
      %s26 = sphi 0, %s23
      %s27 = sphi 0, %s24
      %s28 = sphi 0, %s25
      %s29 = sphi 0, %s26
      %s30 = sphi 0, %s27
      %s31 = sphi 0, %s28
      %s47 = sphi 0, %s49
      %s50 = sphi 0, %s47
      %s51 = sphi 0, %s50
      %s67 = sphi 0, %s51
      %s75 = sphi 0, %s77
      %s78 = sphi 0, %s75
      %s79 = sphi 0, %s78
      %s95 = sphi 0, %s79
      %s101 = sphi 0, %s103
      %s104 = sphi 0, %s101
      %s105 = sphi 0, %s104
      %s121 = sphi 0, %s105
      %s129 = sphi 0, %s131
      %s132 = sphi 0, %s129
      %s133 = sphi 0, %s132
      %s149 = sphi 0, %s133
    $region4: #{tpu_custom_call.1} parent=1 // loop_header_branch
      %19 = sbr.rel (%p17) target = $region8
    $region5: #{tpu_custom_call.1} parent=1 // loop_body
      %s21 = ssub.s32 %s16, 1
      %s22 = ssub.s32 %s16, 2
      %s32 = sadd.s32 1, %s25
      %p33 = scmp.ge.s32.totalorder %s32, 1
      %s34 = scalar_select %p33, 0, %s32
      %s35 = sadd.s32 1, %s24
      %s36 = scalar_select %p33, %s35, %s24
      %p37 = scmp.ge.s32.totalorder %s36, 1
      %s38 = scalar_select %p37, 0, %s36
      %s39 = sadd.s32 1, %s23
      %s40 = scalar_select %p37, %s39, %s23
      %p41 = scmp.ge.s32.totalorder %s40, 2
      %s42 = scalar_select %p41, 0, %s40
      %s43 = ssub.s32 %s23, %s42
      %s44 = ssub.s32 %s25, %s34
      %s45 = sor.u32 %s43, %s44
      %p46 = scmp.eq.s32.totalorder %s45, 0
      %s48 = sadd.s32 %s47, 1
      %s49 = scalar_select %p46, %s47, %s48
      %p52 = pneg %p46
      %p53 = scmp.eq.s32.totalorder %s16, 1
      %p54 = por %p52, %p53
      %p55 = scmp.ne.s32.totalorder %s47, %s50
      %p56 = scmp.eq.s32.totalorder %s16, 0
      %p57 = por %p55, %p56
      %p58 = scmp.ne.s32.totalorder %s47, %s50
      %p59 = scmp.eq.s32.totalorder %s21, 1
      %p60 = por %p58, %p59
      %p61 = scmp.ne.s32.totalorder %s50, %s51
      %p62 = scmp.eq.s32.totalorder %s21, 0
      %p63 = por %p61, %p62
      %p64 = scmp.ne.s32.totalorder %s50, %s51
      %p65 = scmp.eq.s32.totalorder %s22, 1
      %p66 = por %p64, %p65
      %p68 = scmp.ne.s32.totalorder %s51, %s67
      %p69 = scmp.eq.s32.totalorder %s22, 0
      %p70 = por %p68, %p69
      %s71 = ssub.s32 %s25, %s34
      %s72 = ssub.s32 %s24, %s38
      %s73 = sor.u32 %s71, %s72
      %p74 = scmp.eq.s32.totalorder %s73, 0
      %s76 = sadd.s32 %s75, 1
      %s77 = scalar_select %p74, %s75, %s76
      %p80 = pneg %p74
      %p81 = scmp.eq.s32.totalorder %s16, 1
      %p82 = por %p80, %p81
      %p83 = scmp.ne.s32.totalorder %s75, %s78
      %p84 = scmp.eq.s32.totalorder %s16, 0
      %p85 = por %p83, %p84
      %p86 = scmp.ne.s32.totalorder %s75, %s78
      %p87 = scmp.eq.s32.totalorder %s21, 1
      %p88 = por %p86, %p87
      %p89 = scmp.ne.s32.totalorder %s78, %s79
      %p90 = scmp.eq.s32.totalorder %s21, 0
      %p91 = por %p89, %p90
      %p92 = scmp.ne.s32.totalorder %s78, %s79
      %p93 = scmp.eq.s32.totalorder %s22, 1
      %p94 = por %p92, %p93
      %p96 = scmp.ne.s32.totalorder %s79, %s95
      %p97 = scmp.eq.s32.totalorder %s22, 0
      %p98 = por %p96, %p97
      %s99 = ssub.s32 %s24, %s38
      %p100 = scmp.eq.s32.totalorder %s99, 0
      %s102 = sadd.s32 %s101, 1
      %s103 = scalar_select %p100, %s101, %s102
      %p106 = pneg %p100
      %p107 = scmp.eq.s32.totalorder %s16, 1
      %p108 = por %p106, %p107
      %p109 = scmp.ne.s32.totalorder %s101, %s104
      %p110 = scmp.eq.s32.totalorder %s16, 0
      %p111 = por %p109, %p110
      %p112 = scmp.ne.s32.totalorder %s101, %s104
      %p113 = scmp.eq.s32.totalorder %s21, 1
      %p114 = por %p112, %p113
      %p115 = scmp.ne.s32.totalorder %s104, %s105
      %p116 = scmp.eq.s32.totalorder %s21, 0
      %p117 = por %p115, %p116
      %p118 = scmp.ne.s32.totalorder %s104, %s105
      %p119 = scmp.eq.s32.totalorder %s22, 1
      %p120 = por %p118, %p119
      %p122 = scmp.ne.s32.totalorder %s105, %s121
      %p123 = scmp.eq.s32.totalorder %s22, 0
      %p124 = por %p122, %p123
      %s125 = ssub.s32 %s23, %s42
      %s126 = ssub.s32 %s24, %s38
      %s127 = sor.u32 %s125, %s126
      %p128 = scmp.eq.s32.totalorder %s127, 0
      %s130 = sadd.s32 %s129, 1
      %s131 = scalar_select %p128, %s129, %s130
      %p134 = pneg %p128
      %p135 = scmp.eq.s32.totalorder %s16, 1
      %p136 = por %p134, %p135
      %p137 = scmp.ne.s32.totalorder %s129, %s132
      %p138 = scmp.eq.s32.totalorder %s16, 0
      %p139 = por %p137, %p138
      %p140 = scmp.ne.s32.totalorder %s129, %s132
      %p141 = scmp.eq.s32.totalorder %s21, 1
      %p142 = por %p140, %p141
      %p143 = scmp.ne.s32.totalorder %s132, %s133
      %p144 = scmp.eq.s32.totalorder %s21, 0
      %p145 = por %p143, %p144
      %p146 = scmp.ne.s32.totalorder %s132, %s133
      %p147 = scmp.eq.s32.totalorder %s22, 1
      %p148 = por %p146, %p147
      %p150 = scmp.ne.s32.totalorder %s133, %s149
      %p151 = scmp.eq.s32.totalorder %s22, 0
      %p152 = por %p150, %p151
      %p153 = scmp.le.s32.totalorder 1, %s16
      %p154 = scmp.lt.s32.totalorder %s16, 3
      %p155 = pnand %p153, %p154
      %p156 = pneg %p155
      // Predicated region
      $region9: #{tpu_custom_call.1} parent=5 // pred_check
        _
      $region10: #{tpu_custom_call.1} parent=5 // pred_check_branch
        %158 = sbr.rel (%p155) target = $region12
      $region11: #{tpu_custom_call.1} parent=5 // pred_region
        %s159 = ssub.s32 %s16, 1
        // Predicated region
        $region13: #{tpu_custom_call.1} parent=11 // pred_check
          %p160 = pneg %p91
        $region14: #{tpu_custom_call.1} parent=11 // pred_check_branch
          %162 = sbr.rel (%p160) target = $region16
        $region15: #{tpu_custom_call.1} parent=11 // pred_region
          %s163 = smul.u32 32, %s28
          %165 = vsyncadd [#allocation7], 0
          %s166 = sadd.s32 %s27, %s163
          %s167 = smul.addr %s166, 4
          %s168 = scalar_lea.hbm %s1, %s167
          %s169 = sshll.u32 %s168, 4
          %s170 = int_to_ptr.hbm [resolvable:$true] %s169
          %s171 = sshll.u32 [#allocation6], 4
          %s172 = int_to_ptr.vmem [resolvable:$true] %s171
          %177 = dma.hbm_to_vmem [thread:$0]  %s170, 2048, %s172, [#allocation7], 64, 64, 4
        $region16: #{tpu_custom_call.1} parent=11 // pred_fallthru
          _
        // Predicated region
        $region17: #{tpu_custom_call.1} parent=11 // pred_check
          %p178 = pneg %p117
        $region18: #{tpu_custom_call.1} parent=11 // pred_check_branch
          %180 = sbr.rel (%p178) target = $region20
        $region19: #{tpu_custom_call.1} parent=11 // pred_region
          %p181 = scmp.lt.s32.totalorder %s27, 0
          %s182 = scalar_select %p181, %s27, 0
          %s183 = scalar_lea.vmem %s2, %s182
        $region20: #{tpu_custom_call.1} parent=11 // pred_fallthru
          _
      $region12: #{tpu_custom_call.1} parent=5 // pred_fallthru
        _
      %p184 = scmp.lt.s32.totalorder %s16, 2
      // Predicated region
      $region21: #{tpu_custom_call.1} parent=5 // pred_check
        %p185 = pneg %p184
      $region22: #{tpu_custom_call.1} parent=5 // pred_check_branch
        %187 = sbr.rel (%p185) target = $region24
      $region23: #{tpu_custom_call.1} parent=5 // pred_region
        // Predicated region
        $region25: #{tpu_custom_call.1} parent=23 // pred_check
          %p188 = pneg %p57
        $region26: #{tpu_custom_call.1} parent=23 // pred_check_branch
          %190 = sbr.rel (%p188) target = $region28
        $region27: #{tpu_custom_call.1} parent=23 // pred_region
          %s191 = sand.u32 %s47, 1
          %s192 = scalar_lea.sflag [#allocation4], %s191
          %s193 = sand.u32 %s47, 1
          %s194 = smul.addr %s193, 256
          %s195 = scalar_lea.vmem [#allocation3], %s194
          %s196 = smul.u32 32, %s23
          %s197 = smul.u32 2, %s25
          %199 = vsyncadd %s192, 0
          %s200 = smul.addr %s196, 2
          %s201 = sadd.s32 %s197, %s200
          %s202 = smul.addr %s201, 4
          %s203 = scalar_lea.hbm %s0, %s202
          %s204 = sshll.u32 %s203, 4
          %s205 = int_to_ptr.hbm [resolvable:$true] %s204
          %s206 = sshll.u32 %s195, 4
          %s207 = int_to_ptr.vmem [resolvable:$true] %s206
          %212 = dma.hbm_to_vmem [thread:$0]  %s205, 4096, %s207, %s192, 128, 128, 8
        $region28: #{tpu_custom_call.1} parent=23 // pred_fallthru
          _
      $region24: #{tpu_custom_call.1} parent=5 // pred_fallthru
        _
      %p213 = scmp.le.s32.totalorder 1, %s16
      %p214 = scmp.lt.s32.totalorder %s16, 3
      %p215 = pnand %p213, %p214
      %p216 = pneg %p215
      // Predicated region
      $region29: #{tpu_custom_call.1} parent=5 // pred_check
        _
      $region30: #{tpu_custom_call.1} parent=5 // pred_check_branch
        %218 = sbr.rel (%p215) target = $region32
      $region31: #{tpu_custom_call.1} parent=5 // pred_region
        %s219 = ssub.s32 %s16, 1
        %s220 = sand.u32 %s50, 1
        %s221 = scalar_lea.sflag [#allocation4], %s220
        %s222 = sand.u32 %s50, 1
        %s223 = smul.addr %s222, 256
        %s224 = scalar_lea.vmem [#allocation3], %s223
        // Predicated region
        $region33: #{tpu_custom_call.1} parent=31 // pred_check
          %p225 = pneg %p63
        $region34: #{tpu_custom_call.1} parent=31 // pred_check_branch
          %227 = sbr.rel (%p225) target = $region36
        $region35: #{tpu_custom_call.1} parent=31 // pred_region
          %229 = dma.done %s221, 4096
        $region36: #{tpu_custom_call.1} parent=31 // pred_fallthru
          _
        // Predicated region
        $region37: #{tpu_custom_call.1} parent=31 // pred_check
          %p230 = pneg %p91
        $region38: #{tpu_custom_call.1} parent=31 // pred_check_branch
          %232 = sbr.rel (%p230) target = $region40
        $region39: #{tpu_custom_call.1} parent=31 // pred_region
          %234 = dma.done [#allocation7], 2048
        $region40: #{tpu_custom_call.1} parent=31 // pred_fallthru
          _
        %s235 = sand.u32 %s50, 1
        %s236 = scalar_lea.sflag [#allocation4], %s235
        %s237 = sand.u32 %s50, 1
        %s238 = smul.addr %s237, 256
        %s239 = scalar_lea.vmem [#allocation3], %s238
        %p240 = pneg %p63
        %p241 = pneg %p60
        %p242 = pneg %p91
        %p243 = pneg %p88
        %p244 = scmp.lt.s32.totalorder %s27, 0
        %s245 = scalar_select %p244, %s27, 0
        %s246 = scalar_lea.vmem %s2, %s245
        %p247 = pneg %p117
        %p248 = pneg %p114
        %p249 = pneg %p145
        %p250 = pneg %p142
        %s251 = sand.u32 %s132, 1
        %s252 = scalar_lea.sflag [#allocation5], %s251
        %s253 = sand.u32 %s132, 1
        %s254 = smul.addr %s253, 128
        %s255 = scalar_lea.vmem [#allocation8], %s254
        %s256 = smul.u32 32, %s26
        %s257 = smul.u32 2, %s28
        %s258 = smul.u32 32, %s28
        %p259 = scmp.lt.s32.totalorder %s27, 0
        %s260 = scalar_select %p259, %s27, 0
        %s261 = scalar_lea.vmem %s2, %s260
        %s262 = smul.u32 32, %s26
        %p263 = scmp.eq.s32.totalorder %s28, 0
        // Predicated region
        $region41: #{tpu_custom_call.1} parent=31 // pred_check
          %p264 = pneg %p263
        $region42: #{tpu_custom_call.1} parent=31 // pred_check_branch
          %266 = sbr.rel (%p264) target = $region44
        $region43: #{tpu_custom_call.1} parent=31 // pred_region
          %267 = vst [vmem:[#allocation2] sm:$0xff] 0.0
          %268 = vst [vmem:[#allocation2 + $0x8] sm:$0xff] 0.0
          %269 = vst [vmem:[#allocation2 + $0x10] sm:$0xff] 0.0
          %270 = vst [vmem:[#allocation2 + $0x18] sm:$0xff] 0.0
          %271 = vst [vmem:[#allocation2 + $0x20] sm:$0xff] 0.0
          %272 = vst [vmem:[#allocation2 + $0x28] sm:$0xff] 0.0
          %273 = vst [vmem:[#allocation2 + $0x30] sm:$0xff] 0.0
          %274 = vst [vmem:[#allocation2 + $0x38] sm:$0xff] 0.0
          %275 = vst [vmem:[#allocation2 + $0x40] sm:$0xff] 0.0
          %276 = vst [vmem:[#allocation2 + $0x48] sm:$0xff] 0.0
          %277 = vst [vmem:[#allocation2 + $0x50] sm:$0xff] 0.0
          %278 = vst [vmem:[#allocation2 + $0x58] sm:$0xff] 0.0
          %279 = vst [vmem:[#allocation2 + $0x60] sm:$0xff] 0.0
          %280 = vst [vmem:[#allocation2 + $0x68] sm:$0xff] 0.0
          %281 = vst [vmem:[#allocation2 + $0x70] sm:$0xff] 0.0
          %282 = vst [vmem:[#allocation2 + $0x78] sm:$0xff] 0.0
          %283 = vst [vmem:[#allocation2 + $0x80] sm:$0xff] 0.0
          %284 = vst [vmem:[#allocation2 + $0x88] sm:$0xff] 0.0
          %285 = vst [vmem:[#allocation2 + $0x90] sm:$0xff] 0.0
          %286 = vst [vmem:[#allocation2 + $0x98] sm:$0xff] 0.0
          %287 = vst [vmem:[#allocation2 + $0xa0] sm:$0xff] 0.0
          %288 = vst [vmem:[#allocation2 + $0xa8] sm:$0xff] 0.0
          %289 = vst [vmem:[#allocation2 + $0xb0] sm:$0xff] 0.0
          %290 = vst [vmem:[#allocation2 + $0xb8] sm:$0xff] 0.0
          %291 = vst [vmem:[#allocation2 + $0xc0] sm:$0xff] 0.0
          %292 = vst [vmem:[#allocation2 + $0xc8] sm:$0xff] 0.0
          %293 = vst [vmem:[#allocation2 + $0xd0] sm:$0xff] 0.0
          %294 = vst [vmem:[#allocation2 + $0xd8] sm:$0xff] 0.0
          %295 = vst [vmem:[#allocation2 + $0xe0] sm:$0xff] 0.0
          %296 = vst [vmem:[#allocation2 + $0xe8] sm:$0xff] 0.0
          %297 = vst [vmem:[#allocation2 + $0xf0] sm:$0xff] 0.0
          %298 = vst [vmem:[#allocation2 + $0xf8] sm:$0xff] 0.0
        $region44: #{tpu_custom_call.1} parent=31 // pred_fallthru
          _
        %v299 = vld [vmem:[#allocation2] sm:$0xff]
        %v300 = vld [vmem:[#allocation2 + $0x8] sm:$0xff]
        %v301 = vld [vmem:[#allocation2 + $0x10] sm:$0xff]
        %v302 = vld [vmem:[#allocation2 + $0x18] sm:$0xff]
        %v303 = vld [vmem:[#allocation2 + $0x20] sm:$0xff]
        %v304 = vld [vmem:[#allocation2 + $0x28] sm:$0xff]
        %v305 = vld [vmem:[#allocation2 + $0x30] sm:$0xff]
        %v306 = vld [vmem:[#allocation2 + $0x38] sm:$0xff]
        %v307 = vld [vmem:[#allocation2 + $0x40] sm:$0xff]
        %v308 = vld [vmem:[#allocation2 + $0x48] sm:$0xff]
        %v309 = vld [vmem:[#allocation2 + $0x50] sm:$0xff]
        %v310 = vld [vmem:[#allocation2 + $0x58] sm:$0xff]
        %v311 = vld [vmem:[#allocation2 + $0x60] sm:$0xff]
        %v312 = vld [vmem:[#allocation2 + $0x68] sm:$0xff]
        %v313 = vld [vmem:[#allocation2 + $0x70] sm:$0xff]
        %v314 = vld [vmem:[#allocation2 + $0x78] sm:$0xff]
        %v315 = vld [vmem:[#allocation2 + $0x80] sm:$0xff]
        %v316 = vld [vmem:[#allocation2 + $0x88] sm:$0xff]
        %v317 = vld [vmem:[#allocation2 + $0x90] sm:$0xff]
        %v318 = vld [vmem:[#allocation2 + $0x98] sm:$0xff]
        %v319 = vld [vmem:[#allocation2 + $0xa0] sm:$0xff]
        %v320 = vld [vmem:[#allocation2 + $0xa8] sm:$0xff]
        %v321 = vld [vmem:[#allocation2 + $0xb0] sm:$0xff]
        %v322 = vld [vmem:[#allocation2 + $0xb8] sm:$0xff]
        %v323 = vld [vmem:[#allocation2 + $0xc0] sm:$0xff]
        %v324 = vld [vmem:[#allocation2 + $0xc8] sm:$0xff]
        %v325 = vld [vmem:[#allocation2 + $0xd0] sm:$0xff]
        %v326 = vld [vmem:[#allocation2 + $0xd8] sm:$0xff]
        %v327 = vld [vmem:[#allocation2 + $0xe0] sm:$0xff]
        %v328 = vld [vmem:[#allocation2 + $0xe8] sm:$0xff]
        %v329 = vld [vmem:[#allocation2 + $0xf0] sm:$0xff]
        %v330 = vld [vmem:[#allocation2 + $0xf8] sm:$0xff]
        %v331 = vld [vmem:[%s224] sm:$0xff]
        %v332 = vld [vmem:[%s224 + $0x8] sm:$0xff]
        %v333 = vld [vmem:[%s224 + $0x10] sm:$0xff]
        %v334 = vld [vmem:[%s224 + $0x18] sm:$0xff]
        %v335 = vld [vmem:[%s224 + $0x20] sm:$0xff]
        %v336 = vld [vmem:[%s224 + $0x28] sm:$0xff]
        %v337 = vld [vmem:[%s224 + $0x30] sm:$0xff]
        %v338 = vld [vmem:[%s224 + $0x38] sm:$0xff]
        %v339 = vld [vmem:[%s224 + $0x40] sm:$0xff]
        %v340 = vld [vmem:[%s224 + $0x48] sm:$0xff]
        %v341 = vld [vmem:[%s224 + $0x50] sm:$0xff]
        %v342 = vld [vmem:[%s224 + $0x58] sm:$0xff]
        %v343 = vld [vmem:[%s224 + $0x60] sm:$0xff]
        %v344 = vld [vmem:[%s224 + $0x68] sm:$0xff]
        %v345 = vld [vmem:[%s224 + $0x70] sm:$0xff]
        %v346 = vld [vmem:[%s224 + $0x78] sm:$0xff]
        %v347 = vld [vmem:[%s224 + $0x80] sm:$0xff]
        %v348 = vld [vmem:[%s224 + $0x88] sm:$0xff]
        %v349 = vld [vmem:[%s224 + $0x90] sm:$0xff]
        %v350 = vld [vmem:[%s224 + $0x98] sm:$0xff]
        %v351 = vld [vmem:[%s224 + $0xa0] sm:$0xff]
        %v352 = vld [vmem:[%s224 + $0xa8] sm:$0xff]
        %v353 = vld [vmem:[%s224 + $0xb0] sm:$0xff]
        %v354 = vld [vmem:[%s224 + $0xb8] sm:$0xff]
        %v355 = vld [vmem:[%s224 + $0xc0] sm:$0xff]
        %v356 = vld [vmem:[%s224 + $0xc8] sm:$0xff]
        %v357 = vld [vmem:[%s224 + $0xd0] sm:$0xff]
        %v358 = vld [vmem:[%s224 + $0xd8] sm:$0xff]
        %v359 = vld [vmem:[%s224 + $0xe0] sm:$0xff]
        %v360 = vld [vmem:[%s224 + $0xe8] sm:$0xff]
        %v361 = vld [vmem:[%s224 + $0xf0] sm:$0xff]
        %v362 = vld [vmem:[%s224 + $0xf8] sm:$0xff]
        %v363 = vld [vmem:[#allocation6] sm:$0xf]
        %v364 = vld [vmem:[#allocation6 + $0x4] sm:$0xf]
        %v365 = vld [vmem:[#allocation6 + $0x8] sm:$0xf]
        %v366 = vld [vmem:[#allocation6 + $0xc] sm:$0xf]
        %v367 = vld [vmem:[#allocation6 + $0x10] sm:$0xf]
        %v368 = vld [vmem:[#allocation6 + $0x14] sm:$0xf]
        %v369 = vld [vmem:[#allocation6 + $0x18] sm:$0xf]
        %v370 = vld [vmem:[#allocation6 + $0x1c] sm:$0xf]
        %v371 = vld [vmem:[#allocation6 + $0x20] sm:$0xf]
        %v372 = vld [vmem:[#allocation6 + $0x24] sm:$0xf]
        %v373 = vld [vmem:[#allocation6 + $0x28] sm:$0xf]
        %v374 = vld [vmem:[#allocation6 + $0x2c] sm:$0xf]
        %v375 = vld [vmem:[#allocation6 + $0x30] sm:$0xf]
        %v376 = vld [vmem:[#allocation6 + $0x34] sm:$0xf]
        %v377 = vld [vmem:[#allocation6 + $0x38] sm:$0xf]
        %v378 = vld [vmem:[#allocation6 + $0x3c] sm:$0xf]
        %v379 = vld [vmem:[#allocation6 + $0x40] sm:$0xf]
        %v380 = vld [vmem:[#allocation6 + $0x44] sm:$0xf]
        %v381 = vld [vmem:[#allocation6 + $0x48] sm:$0xf]
        %v382 = vld [vmem:[#allocation6 + $0x4c] sm:$0xf]
        %v383 = vld [vmem:[#allocation6 + $0x50] sm:$0xf]
        %v384 = vld [vmem:[#allocation6 + $0x54] sm:$0xf]
        %v385 = vld [vmem:[#allocation6 + $0x58] sm:$0xf]
        %v386 = vld [vmem:[#allocation6 + $0x5c] sm:$0xf]
        %v387 = vld [vmem:[#allocation6 + $0x60] sm:$0xf]
        %v388 = vld [vmem:[#allocation6 + $0x64] sm:$0xf]
        %v389 = vld [vmem:[#allocation6 + $0x68] sm:$0xf]
        %v390 = vld [vmem:[#allocation6 + $0x6c] sm:$0xf]
        %v391 = vld [vmem:[#allocation6 + $0x70] sm:$0xf]
        %v392 = vld [vmem:[#allocation6 + $0x74] sm:$0xf]
        %v393 = vld [vmem:[#allocation6 + $0x78] sm:$0xf]
        %v394 = vld [vmem:[#allocation6 + $0x7c] sm:$0xf]
        %v427 = vunpack.c.l.b16 %v331
        %v428 = vunpack.c.h.b16 %v331
        %v429 = vunpack.c.l.b16 %v332
        %v430 = vunpack.c.h.b16 %v332
        %v431 = vunpack.c.l.b16 %v333
        %v432 = vunpack.c.h.b16 %v333
        %v433 = vunpack.c.l.b16 %v334
        %v434 = vunpack.c.h.b16 %v334
        %v435 = vunpack.c.l.b16 %v335
        %v436 = vunpack.c.h.b16 %v335
        %v437 = vunpack.c.l.b16 %v336
        %v438 = vunpack.c.h.b16 %v336
        %v439 = vunpack.c.l.b16 %v337
        %v440 = vunpack.c.h.b16 %v337
        %v441 = vunpack.c.l.b16 %v338
        %v442 = vunpack.c.h.b16 %v338
        %v443 = vunpack.c.l.b16 %v339
        %v444 = vunpack.c.h.b16 %v339
        %v445 = vunpack.c.l.b16 %v340
        %v446 = vunpack.c.h.b16 %v340
        %v447 = vunpack.c.l.b16 %v341
        %v448 = vunpack.c.h.b16 %v341
        %v449 = vunpack.c.l.b16 %v342
        %v450 = vunpack.c.h.b16 %v342
        %v451 = vunpack.c.l.b16 %v343
        %v452 = vunpack.c.h.b16 %v343
        %v453 = vunpack.c.l.b16 %v344
        %v454 = vunpack.c.h.b16 %v344
        %v455 = vunpack.c.l.b16 %v345
        %v456 = vunpack.c.h.b16 %v345
        %v457 = vunpack.c.l.b16 %v346
        %v458 = vunpack.c.h.b16 %v346
        %v459 = vunpack.c.l.b16 %v347
        %v460 = vunpack.c.h.b16 %v347
        %v461 = vunpack.c.l.b16 %v348
        %v462 = vunpack.c.h.b16 %v348
        %v463 = vunpack.c.l.b16 %v349
        %v464 = vunpack.c.h.b16 %v349
        %v465 = vunpack.c.l.b16 %v350
        %v466 = vunpack.c.h.b16 %v350
        %v467 = vunpack.c.l.b16 %v351
        %v468 = vunpack.c.h.b16 %v351
        %v469 = vunpack.c.l.b16 %v352
        %v470 = vunpack.c.h.b16 %v352
        %v471 = vunpack.c.l.b16 %v353
        %v472 = vunpack.c.h.b16 %v353
        %v473 = vunpack.c.l.b16 %v354
        %v474 = vunpack.c.h.b16 %v354
        %v475 = vunpack.c.l.b16 %v355
        %v476 = vunpack.c.h.b16 %v355
        %v477 = vunpack.c.l.b16 %v356
        %v478 = vunpack.c.h.b16 %v356
        %v479 = vunpack.c.l.b16 %v357
        %v480 = vunpack.c.h.b16 %v357
        %v481 = vunpack.c.l.b16 %v358
        %v482 = vunpack.c.h.b16 %v358
        %v483 = vunpack.c.l.b16 %v359
        %v484 = vunpack.c.h.b16 %v359
        %v485 = vunpack.c.l.b16 %v360
        %v486 = vunpack.c.h.b16 %v360
        %v487 = vunpack.c.l.b16 %v361
        %v488 = vunpack.c.h.b16 %v361
        %v489 = vunpack.c.l.b16 %v362
        %v490 = vunpack.c.h.b16 %v362
        %v491 = vpack.c.b16 %v429, %v427
        %v492 = vpack.c.b16 %v430, %v428
        %v493 = vpack.c.b16 %v433, %v431
        %v494 = vpack.c.b16 %v434, %v432
        %v495 = vpack.c.b16 %v437, %v435
        %v496 = vpack.c.b16 %v438, %v436
        %v497 = vpack.c.b16 %v441, %v439
        %v498 = vpack.c.b16 %v442, %v440
        %v499 = vpack.c.b16 %v445, %v443
        %v500 = vpack.c.b16 %v446, %v444
        %v501 = vpack.c.b16 %v449, %v447
        %v502 = vpack.c.b16 %v450, %v448
        %v503 = vpack.c.b16 %v453, %v451
        %v504 = vpack.c.b16 %v454, %v452
        %v505 = vpack.c.b16 %v457, %v455
        %v506 = vpack.c.b16 %v458, %v456
        %v507 = vpack.c.b16 %v461, %v459
        %v508 = vpack.c.b16 %v462, %v460
        %v509 = vpack.c.b16 %v465, %v463
        %v510 = vpack.c.b16 %v466, %v464
        %v511 = vpack.c.b16 %v469, %v467
        %v512 = vpack.c.b16 %v470, %v468
        %v513 = vpack.c.b16 %v473, %v471
        %v514 = vpack.c.b16 %v474, %v472
        %v515 = vpack.c.b16 %v477, %v475
        %v516 = vpack.c.b16 %v478, %v476
        %v517 = vpack.c.b16 %v481, %v479
        %v518 = vpack.c.b16 %v482, %v480
        %v519 = vpack.c.b16 %v485, %v483
        %v520 = vpack.c.b16 %v486, %v484
        %v521 = vpack.c.b16 %v489, %v487
        %v522 = vpack.c.b16 %v490, %v488
        %v587 = vunpack.c.l.b16 %v363
        %v588 = vunpack.c.l.b16 %v364
        %v589 = vunpack.c.l.b16 %v365
        %v590 = vunpack.c.l.b16 %v366
        %v591 = vunpack.c.l.b16 %v367
        %v592 = vunpack.c.l.b16 %v368
        %v593 = vunpack.c.l.b16 %v369
        %v594 = vunpack.c.l.b16 %v370
        %v595 = vunpack.c.l.b16 %v371
        %v596 = vunpack.c.l.b16 %v372
        %v597 = vunpack.c.l.b16 %v373
        %v598 = vunpack.c.l.b16 %v374
        %v599 = vunpack.c.l.b16 %v375
        %v600 = vunpack.c.l.b16 %v376
        %v601 = vunpack.c.l.b16 %v377
        %v602 = vunpack.c.l.b16 %v378
        %v603 = vunpack.c.l.b16 %v379
        %v604 = vunpack.c.l.b16 %v380
        %v605 = vunpack.c.l.b16 %v381
        %v606 = vunpack.c.l.b16 %v382
        %v607 = vunpack.c.l.b16 %v383
        %v608 = vunpack.c.l.b16 %v384
        %v609 = vunpack.c.l.b16 %v385
        %v610 = vunpack.c.l.b16 %v386
        %v611 = vunpack.c.l.b16 %v387
        %v612 = vunpack.c.l.b16 %v388
        %v613 = vunpack.c.l.b16 %v389
        %v614 = vunpack.c.l.b16 %v390
        %v615 = vunpack.c.l.b16 %v391
        %v616 = vunpack.c.l.b16 %v392
        %v617 = vunpack.c.l.b16 %v393
        %v618 = vunpack.c.l.b16 %v394
        %v619 = vpack.c.b16 %v588, %v587
        %v620 = vpack.c.b16 %v590, %v589
        %v621 = vpack.c.b16 %v592, %v591
        %v622 = vpack.c.b16 %v594, %v593
        %v623 = vpack.c.b16 %v596, %v595
        %v624 = vpack.c.b16 %v598, %v597
        %v625 = vpack.c.b16 %v600, %v599
        %v626 = vpack.c.b16 %v602, %v601
        %v627 = vpack.c.b16 %v604, %v603
        %v628 = vpack.c.b16 %v606, %v605
        %v629 = vpack.c.b16 %v608, %v607
        %v630 = vpack.c.b16 %v610, %v609
        %v631 = vpack.c.b16 %v612, %v611
        %v632 = vpack.c.b16 %v614, %v613
        %v633 = vpack.c.b16 %v616, %v615
        %v634 = vpack.c.b16 %v618, %v617
        %651 = vmatpush.bf16.msra.mxu0 %v626
        %652 = vmatpush.bf16.msra.mxu0 %v625
        %653 = vmatpush.bf16.msra.mxu0 %v624
        %654 = vmatpush.bf16.msra.mxu0 %v623
        %655 = vmatpush.bf16.msra.mxu0 %v622
        %656 = vmatpush.bf16.msra.mxu0 %v621
        %657 = vmatpush.bf16.msra.mxu0 %v620
        %658 = vmatpush.bf16.msra.mxu0 %v619
        %659 = vmatmul.bf16.gmra.mxu0 %v491
        %v660 = vpop.f32.mrf.mxu0
        %v661 = vadd.f32 0.0, %v660
        %v662 = vpop.f32.mrf.mxu0
        %v663 = vadd.f32 0.0, %v662
        %664 = vmatmul.bf16.gmra.mxu0 %v493
        %v665 = vpop.f32.mrf.mxu0
        %v666 = vadd.f32 0.0, %v665
        %v667 = vpop.f32.mrf.mxu0
        %v668 = vadd.f32 0.0, %v667
        %669 = vmatmul.bf16.gmra.mxu0 %v495
        %v670 = vpop.f32.mrf.mxu0
        %v671 = vadd.f32 0.0, %v670
        %v672 = vpop.f32.mrf.mxu0
        %v673 = vadd.f32 0.0, %v672
        %674 = vmatmul.bf16.gmra.mxu0 %v497
        %v675 = vpop.f32.mrf.mxu0
        %v676 = vadd.f32 0.0, %v675
        %v677 = vpop.f32.mrf.mxu0
        %v678 = vadd.f32 0.0, %v677
        %679 = vmatmul.bf16.gmra.mxu0 %v499
        %v680 = vpop.f32.mrf.mxu0
        %v681 = vadd.f32 0.0, %v680
        %v682 = vpop.f32.mrf.mxu0
        %v683 = vadd.f32 0.0, %v682
        %684 = vmatmul.bf16.gmra.mxu0 %v501
        %v685 = vpop.f32.mrf.mxu0
        %v686 = vadd.f32 0.0, %v685
        %v687 = vpop.f32.mrf.mxu0
        %v688 = vadd.f32 0.0, %v687
        %689 = vmatmul.bf16.gmra.mxu0 %v503
        %v690 = vpop.f32.mrf.mxu0
        %v691 = vadd.f32 0.0, %v690
        %v692 = vpop.f32.mrf.mxu0
        %v693 = vadd.f32 0.0, %v692
        %694 = vmatmul.bf16.gmra.mxu0 %v505
        %v695 = vpop.f32.mrf.mxu0
        %v696 = vadd.f32 0.0, %v695
        %v697 = vpop.f32.mrf.mxu0
        %v698 = vadd.f32 0.0, %v697
        %699 = vmatmul.bf16.gmra.mxu0 %v507
        %v700 = vpop.f32.mrf.mxu0
        %v701 = vadd.f32 0.0, %v700
        %v702 = vpop.f32.mrf.mxu0
        %v703 = vadd.f32 0.0, %v702
        %704 = vmatmul.bf16.gmra.mxu0 %v509
        %v705 = vpop.f32.mrf.mxu0
        %v706 = vadd.f32 0.0, %v705
        %v707 = vpop.f32.mrf.mxu0
        %v708 = vadd.f32 0.0, %v707
        %709 = vmatmul.bf16.gmra.mxu0 %v511
        %v710 = vpop.f32.mrf.mxu0
        %v711 = vadd.f32 0.0, %v710
        %v712 = vpop.f32.mrf.mxu0
        %v713 = vadd.f32 0.0, %v712
        %714 = vmatmul.bf16.gmra.mxu0 %v513
        %v715 = vpop.f32.mrf.mxu0
        %v716 = vadd.f32 0.0, %v715
        %v717 = vpop.f32.mrf.mxu0
        %v718 = vadd.f32 0.0, %v717
        %719 = vmatmul.bf16.gmra.mxu0 %v515
        %v720 = vpop.f32.mrf.mxu0
        %v721 = vadd.f32 0.0, %v720
        %v722 = vpop.f32.mrf.mxu0
        %v723 = vadd.f32 0.0, %v722
        %724 = vmatmul.bf16.gmra.mxu0 %v517
        %v725 = vpop.f32.mrf.mxu0
        %v726 = vadd.f32 0.0, %v725
        %v727 = vpop.f32.mrf.mxu0
        %v728 = vadd.f32 0.0, %v727
        %729 = vmatmul.bf16.gmra.mxu0 %v519
        %v730 = vpop.f32.mrf.mxu0
        %v731 = vadd.f32 0.0, %v730
        %v732 = vpop.f32.mrf.mxu0
        %v733 = vadd.f32 0.0, %v732
        %734 = vmatmul.bf16.gmra.mxu0 %v521
        %v735 = vpop.f32.mrf.mxu0
        %v736 = vadd.f32 0.0, %v735
        %v737 = vpop.f32.mrf.mxu0
        %v738 = vadd.f32 0.0, %v737
        %739 = vdwg.mxu0
        %740 = vmatpush.bf16.msra.mxu0 %v634
        %741 = vmatpush.bf16.msra.mxu0 %v633
        %742 = vmatpush.bf16.msra.mxu0 %v632
        %743 = vmatpush.bf16.msra.mxu0 %v631
        %744 = vmatpush.bf16.msra.mxu0 %v630
        %745 = vmatpush.bf16.msra.mxu0 %v629
        %746 = vmatpush.bf16.msra.mxu0 %v628
        %747 = vmatpush.bf16.msra.mxu0 %v627
        %748 = vmatmul.bf16.gmra.mxu0 %v492
        %v749 = vpop.f32.mrf.mxu0
        %v750 = vadd.f32 %v661, %v749
        %v751 = vpop.f32.mrf.mxu0
        %v752 = vadd.f32 %v663, %v751
        %753 = vmatmul.bf16.gmra.mxu0 %v494
        %v754 = vpop.f32.mrf.mxu0
        %v755 = vadd.f32 %v666, %v754
        %v756 = vpop.f32.mrf.mxu0
        %v757 = vadd.f32 %v668, %v756
        %758 = vmatmul.bf16.gmra.mxu0 %v496
        %v759 = vpop.f32.mrf.mxu0
        %v760 = vadd.f32 %v671, %v759
        %v761 = vpop.f32.mrf.mxu0
        %v762 = vadd.f32 %v673, %v761
        %763 = vmatmul.bf16.gmra.mxu0 %v498
        %v764 = vpop.f32.mrf.mxu0
        %v765 = vadd.f32 %v676, %v764
        %v766 = vpop.f32.mrf.mxu0
        %v767 = vadd.f32 %v678, %v766
        %768 = vmatmul.bf16.gmra.mxu0 %v500
        %v769 = vpop.f32.mrf.mxu0
        %v770 = vadd.f32 %v681, %v769
        %v771 = vpop.f32.mrf.mxu0
        %v772 = vadd.f32 %v683, %v771
        %773 = vmatmul.bf16.gmra.mxu0 %v502
        %v774 = vpop.f32.mrf.mxu0
        %v775 = vadd.f32 %v686, %v774
        %v776 = vpop.f32.mrf.mxu0
        %v777 = vadd.f32 %v688, %v776
        %778 = vmatmul.bf16.gmra.mxu0 %v504
        %v779 = vpop.f32.mrf.mxu0
        %v780 = vadd.f32 %v691, %v779
        %v781 = vpop.f32.mrf.mxu0
        %v782 = vadd.f32 %v693, %v781
        %783 = vmatmul.bf16.gmra.mxu0 %v506
        %v784 = vpop.f32.mrf.mxu0
        %v785 = vadd.f32 %v696, %v784
        %v786 = vpop.f32.mrf.mxu0
        %v787 = vadd.f32 %v698, %v786
        %788 = vmatmul.bf16.gmra.mxu0 %v508
        %v789 = vpop.f32.mrf.mxu0
        %v790 = vadd.f32 %v701, %v789
        %v791 = vpop.f32.mrf.mxu0
        %v792 = vadd.f32 %v703, %v791
        %793 = vmatmul.bf16.gmra.mxu0 %v510
        %v794 = vpop.f32.mrf.mxu0
        %v795 = vadd.f32 %v706, %v794
        %v796 = vpop.f32.mrf.mxu0
        %v797 = vadd.f32 %v708, %v796
        %798 = vmatmul.bf16.gmra.mxu0 %v512
        %v799 = vpop.f32.mrf.mxu0
        %v800 = vadd.f32 %v711, %v799
        %v801 = vpop.f32.mrf.mxu0
        %v802 = vadd.f32 %v713, %v801
        %803 = vmatmul.bf16.gmra.mxu0 %v514
        %v804 = vpop.f32.mrf.mxu0
        %v805 = vadd.f32 %v716, %v804
        %v806 = vpop.f32.mrf.mxu0
        %v807 = vadd.f32 %v718, %v806
        %808 = vmatmul.bf16.gmra.mxu0 %v516
        %v809 = vpop.f32.mrf.mxu0
        %v810 = vadd.f32 %v721, %v809
        %v811 = vpop.f32.mrf.mxu0
        %v812 = vadd.f32 %v723, %v811
        %813 = vmatmul.bf16.gmra.mxu0 %v518
        %v814 = vpop.f32.mrf.mxu0
        %v815 = vadd.f32 %v726, %v814
        %v816 = vpop.f32.mrf.mxu0
        %v817 = vadd.f32 %v728, %v816
        %818 = vmatmul.bf16.gmra.mxu0 %v520
        %v819 = vpop.f32.mrf.mxu0
        %v820 = vadd.f32 %v731, %v819
        %v821 = vpop.f32.mrf.mxu0
        %v822 = vadd.f32 %v733, %v821
        %823 = vmatmul.bf16.gmra.mxu0 %v522
        %v824 = vpop.f32.mrf.mxu0
        %v825 = vadd.f32 %v736, %v824
        %v826 = vpop.f32.mrf.mxu0
        %v827 = vadd.f32 %v738, %v826
        %828 = vdwg.mxu0
        %v829 = vadd.f32 %v299, %v750
        %v830 = vadd.f32 %v300, %v752
        %v831 = vadd.f32 %v301, %v755
        %v832 = vadd.f32 %v302, %v757
        %v833 = vadd.f32 %v303, %v760
        %v834 = vadd.f32 %v304, %v762
        %v835 = vadd.f32 %v305, %v765
        %v836 = vadd.f32 %v306, %v767
        %v837 = vadd.f32 %v307, %v770
        %v838 = vadd.f32 %v308, %v772
        %v839 = vadd.f32 %v309, %v775
        %v840 = vadd.f32 %v310, %v777
        %v841 = vadd.f32 %v311, %v780
        %v842 = vadd.f32 %v312, %v782
        %v843 = vadd.f32 %v313, %v785
        %v844 = vadd.f32 %v314, %v787
        %v845 = vadd.f32 %v315, %v790
        %v846 = vadd.f32 %v316, %v792
        %v847 = vadd.f32 %v317, %v795
        %v848 = vadd.f32 %v318, %v797
        %v849 = vadd.f32 %v319, %v800
        %v850 = vadd.f32 %v320, %v802
        %v851 = vadd.f32 %v321, %v805
        %v852 = vadd.f32 %v322, %v807
        %v853 = vadd.f32 %v323, %v810
        %v854 = vadd.f32 %v324, %v812
        %v855 = vadd.f32 %v325, %v815
        %v856 = vadd.f32 %v326, %v817
        %v857 = vadd.f32 %v327, %v820
        %v858 = vadd.f32 %v328, %v822
        %v859 = vadd.f32 %v329, %v825
        %v860 = vadd.f32 %v330, %v827
        %861 = vst [vmem:[#allocation2] sm:$0xff] %v829
        %862 = vst [vmem:[#allocation2 + $0x8] sm:$0xff] %v830
        %863 = vst [vmem:[#allocation2 + $0x10] sm:$0xff] %v831
        %864 = vst [vmem:[#allocation2 + $0x18] sm:$0xff] %v832
        %865 = vst [vmem:[#allocation2 + $0x20] sm:$0xff] %v833
        %866 = vst [vmem:[#allocation2 + $0x28] sm:$0xff] %v834
        %867 = vst [vmem:[#allocation2 + $0x30] sm:$0xff] %v835
        %868 = vst [vmem:[#allocation2 + $0x38] sm:$0xff] %v836
        %869 = vst [vmem:[#allocation2 + $0x40] sm:$0xff] %v837
        %870 = vst [vmem:[#allocation2 + $0x48] sm:$0xff] %v838
        %871 = vst [vmem:[#allocation2 + $0x50] sm:$0xff] %v839
        %872 = vst [vmem:[#allocation2 + $0x58] sm:$0xff] %v840
        %873 = vst [vmem:[#allocation2 + $0x60] sm:$0xff] %v841
        %874 = vst [vmem:[#allocation2 + $0x68] sm:$0xff] %v842
        %875 = vst [vmem:[#allocation2 + $0x70] sm:$0xff] %v843
        %876 = vst [vmem:[#allocation2 + $0x78] sm:$0xff] %v844
        %877 = vst [vmem:[#allocation2 + $0x80] sm:$0xff] %v845
        %878 = vst [vmem:[#allocation2 + $0x88] sm:$0xff] %v846
        %879 = vst [vmem:[#allocation2 + $0x90] sm:$0xff] %v847
        %880 = vst [vmem:[#allocation2 + $0x98] sm:$0xff] %v848
        %881 = vst [vmem:[#allocation2 + $0xa0] sm:$0xff] %v849
        %882 = vst [vmem:[#allocation2 + $0xa8] sm:$0xff] %v850
        %883 = vst [vmem:[#allocation2 + $0xb0] sm:$0xff] %v851
        %884 = vst [vmem:[#allocation2 + $0xb8] sm:$0xff] %v852
        %885 = vst [vmem:[#allocation2 + $0xc0] sm:$0xff] %v853
        %886 = vst [vmem:[#allocation2 + $0xc8] sm:$0xff] %v854
        %887 = vst [vmem:[#allocation2 + $0xd0] sm:$0xff] %v855
        %888 = vst [vmem:[#allocation2 + $0xd8] sm:$0xff] %v856
        %889 = vst [vmem:[#allocation2 + $0xe0] sm:$0xff] %v857
        %890 = vst [vmem:[#allocation2 + $0xe8] sm:$0xff] %v858
        %891 = vst [vmem:[#allocation2 + $0xf0] sm:$0xff] %v859
        %892 = vst [vmem:[#allocation2 + $0xf8] sm:$0xff] %v860
        // Predicated region
        $region45: #{tpu_custom_call.1} parent=31 // pred_check
          %p893 = pneg %p263
        $region46: #{tpu_custom_call.1} parent=31 // pred_check_branch
          %895 = sbr.rel (%p893) target = $region48
        $region47: #{tpu_custom_call.1} parent=31 // pred_region
          %v896 = vld [vmem:[#allocation2] sm:$0xff]
          %v897 = vld [vmem:[#allocation2 + $0x8] sm:$0xff]
          %v898 = vld [vmem:[#allocation2 + $0x10] sm:$0xff]
          %v899 = vld [vmem:[#allocation2 + $0x18] sm:$0xff]
          %v900 = vld [vmem:[#allocation2 + $0x20] sm:$0xff]
          %v901 = vld [vmem:[#allocation2 + $0x28] sm:$0xff]
          %v902 = vld [vmem:[#allocation2 + $0x30] sm:$0xff]
          %v903 = vld [vmem:[#allocation2 + $0x38] sm:$0xff]
          %v904 = vld [vmem:[#allocation2 + $0x40] sm:$0xff]
          %v905 = vld [vmem:[#allocation2 + $0x48] sm:$0xff]
          %v906 = vld [vmem:[#allocation2 + $0x50] sm:$0xff]
          %v907 = vld [vmem:[#allocation2 + $0x58] sm:$0xff]
          %v908 = vld [vmem:[#allocation2 + $0x60] sm:$0xff]
          %v909 = vld [vmem:[#allocation2 + $0x68] sm:$0xff]
          %v910 = vld [vmem:[#allocation2 + $0x70] sm:$0xff]
          %v911 = vld [vmem:[#allocation2 + $0x78] sm:$0xff]
          %v912 = vld [vmem:[#allocation2 + $0x80] sm:$0xff]
          %v913 = vld [vmem:[#allocation2 + $0x88] sm:$0xff]
          %v914 = vld [vmem:[#allocation2 + $0x90] sm:$0xff]
          %v915 = vld [vmem:[#allocation2 + $0x98] sm:$0xff]
          %v916 = vld [vmem:[#allocation2 + $0xa0] sm:$0xff]
          %v917 = vld [vmem:[#allocation2 + $0xa8] sm:$0xff]
          %v918 = vld [vmem:[#allocation2 + $0xb0] sm:$0xff]
          %v919 = vld [vmem:[#allocation2 + $0xb8] sm:$0xff]
          %v920 = vld [vmem:[#allocation2 + $0xc0] sm:$0xff]
          %v921 = vld [vmem:[#allocation2 + $0xc8] sm:$0xff]
          %v922 = vld [vmem:[#allocation2 + $0xd0] sm:$0xff]
          %v923 = vld [vmem:[#allocation2 + $0xd8] sm:$0xff]
          %v924 = vld [vmem:[#allocation2 + $0xe0] sm:$0xff]
          %v925 = vld [vmem:[#allocation2 + $0xe8] sm:$0xff]
          %v926 = vld [vmem:[#allocation2 + $0xf0] sm:$0xff]
          %v927 = vld [vmem:[#allocation2 + $0xf8] sm:$0xff]
          %v928 = vld [vmem:[%s261] sm:$0x1]
          %v930 = vperm.slane %v928, 0
          %v932 = vadd.f32 %v896, %v930
          %v933 = vadd.f32 %v897, %v930
          %v934 = vadd.f32 %v898, %v930
          %v935 = vadd.f32 %v899, %v930
          %v936 = vadd.f32 %v900, %v930
          %v937 = vadd.f32 %v901, %v930
          %v938 = vadd.f32 %v902, %v930
          %v939 = vadd.f32 %v903, %v930
          %v940 = vadd.f32 %v904, %v930
          %v941 = vadd.f32 %v905, %v930
          %v942 = vadd.f32 %v906, %v930
          %v943 = vadd.f32 %v907, %v930
          %v944 = vadd.f32 %v908, %v930
          %v945 = vadd.f32 %v909, %v930
          %v946 = vadd.f32 %v910, %v930
          %v947 = vadd.f32 %v911, %v930
          %v948 = vadd.f32 %v912, %v930
          %v949 = vadd.f32 %v913, %v930
          %v950 = vadd.f32 %v914, %v930
          %v951 = vadd.f32 %v915, %v930
          %v952 = vadd.f32 %v916, %v930
          %v953 = vadd.f32 %v917, %v930
          %v954 = vadd.f32 %v918, %v930
          %v955 = vadd.f32 %v919, %v930
          %v956 = vadd.f32 %v920, %v930
          %v957 = vadd.f32 %v921, %v930
          %v958 = vadd.f32 %v922, %v930
          %v959 = vadd.f32 %v923, %v930
          %v960 = vadd.f32 %v924, %v930
          %v961 = vadd.f32 %v925, %v930
          %v962 = vadd.f32 %v926, %v930
          %v963 = vadd.f32 %v927, %v930
          %v964 = vmax.f32 %v932, 0.0
          %v965 = vmax.f32 %v933, 0.0
          %v966 = vmax.f32 %v934, 0.0
          %v967 = vmax.f32 %v935, 0.0
          %v968 = vmax.f32 %v936, 0.0
          %v969 = vmax.f32 %v937, 0.0
          %v970 = vmax.f32 %v938, 0.0
          %v971 = vmax.f32 %v939, 0.0
          %v972 = vmax.f32 %v940, 0.0
          %v973 = vmax.f32 %v941, 0.0
          %v974 = vmax.f32 %v942, 0.0
          %v975 = vmax.f32 %v943, 0.0
          %v976 = vmax.f32 %v944, 0.0
          %v977 = vmax.f32 %v945, 0.0
          %v978 = vmax.f32 %v946, 0.0
          %v979 = vmax.f32 %v947, 0.0
          %v980 = vmax.f32 %v948, 0.0
          %v981 = vmax.f32 %v949, 0.0
          %v982 = vmax.f32 %v950, 0.0
          %v983 = vmax.f32 %v951, 0.0
          %v984 = vmax.f32 %v952, 0.0
          %v985 = vmax.f32 %v953, 0.0
          %v986 = vmax.f32 %v954, 0.0
          %v987 = vmax.f32 %v955, 0.0
          %v988 = vmax.f32 %v956, 0.0
          %v989 = vmax.f32 %v957, 0.0
          %v990 = vmax.f32 %v958, 0.0
          %v991 = vmax.f32 %v959, 0.0
          %v992 = vmax.f32 %v960, 0.0
          %v993 = vmax.f32 %v961, 0.0
          %v994 = vmax.f32 %v962, 0.0
          %v995 = vmax.f32 %v963, 0.0
          %v996 = vpack.c.bf16 %v964, %v964
          %v997 = vpack.c.bf16 %v965, %v965
          %v998 = vpack.c.bf16 %v966, %v966
          %v999 = vpack.c.bf16 %v967, %v967
          %v1000 = vpack.c.bf16 %v968, %v968
          %v1001 = vpack.c.bf16 %v969, %v969
          %v1002 = vpack.c.bf16 %v970, %v970
          %v1003 = vpack.c.bf16 %v971, %v971
          %v1004 = vpack.c.bf16 %v972, %v972
          %v1005 = vpack.c.bf16 %v973, %v973
          %v1006 = vpack.c.bf16 %v974, %v974
          %v1007 = vpack.c.bf16 %v975, %v975
          %v1008 = vpack.c.bf16 %v976, %v976
          %v1009 = vpack.c.bf16 %v977, %v977
          %v1010 = vpack.c.bf16 %v978, %v978
          %v1011 = vpack.c.bf16 %v979, %v979
          %v1012 = vpack.c.bf16 %v980, %v980
          %v1013 = vpack.c.bf16 %v981, %v981
          %v1014 = vpack.c.bf16 %v982, %v982
          %v1015 = vpack.c.bf16 %v983, %v983
          %v1016 = vpack.c.bf16 %v984, %v984
          %v1017 = vpack.c.bf16 %v985, %v985
          %v1018 = vpack.c.bf16 %v986, %v986
          %v1019 = vpack.c.bf16 %v987, %v987
          %v1020 = vpack.c.bf16 %v988, %v988
          %v1021 = vpack.c.bf16 %v989, %v989
          %v1022 = vpack.c.bf16 %v990, %v990
          %v1023 = vpack.c.bf16 %v991, %v991
          %v1024 = vpack.c.bf16 %v992, %v992
          %v1025 = vpack.c.bf16 %v993, %v993
          %v1026 = vpack.c.bf16 %v994, %v994
          %v1027 = vpack.c.bf16 %v995, %v995
          %1028 = vst [vmem:[%s255] sm:$0xf] %v996
          %1029 = vst [vmem:[%s255 + $0x4] sm:$0xf] %v997
          %1030 = vst [vmem:[%s255 + $0x8] sm:$0xf] %v998
          %1031 = vst [vmem:[%s255 + $0xc] sm:$0xf] %v999
          %1032 = vst [vmem:[%s255 + $0x10] sm:$0xf] %v1000
          %1033 = vst [vmem:[%s255 + $0x14] sm:$0xf] %v1001
          %1034 = vst [vmem:[%s255 + $0x18] sm:$0xf] %v1002
          %1035 = vst [vmem:[%s255 + $0x1c] sm:$0xf] %v1003
          %1036 = vst [vmem:[%s255 + $0x20] sm:$0xf] %v1004
          %1037 = vst [vmem:[%s255 + $0x24] sm:$0xf] %v1005
          %1038 = vst [vmem:[%s255 + $0x28] sm:$0xf] %v1006
          %1039 = vst [vmem:[%s255 + $0x2c] sm:$0xf] %v1007
          %1040 = vst [vmem:[%s255 + $0x30] sm:$0xf] %v1008
          %1041 = vst [vmem:[%s255 + $0x34] sm:$0xf] %v1009
          %1042 = vst [vmem:[%s255 + $0x38] sm:$0xf] %v1010
          %1043 = vst [vmem:[%s255 + $0x3c] sm:$0xf] %v1011
          %1044 = vst [vmem:[%s255 + $0x40] sm:$0xf] %v1012
          %1045 = vst [vmem:[%s255 + $0x44] sm:$0xf] %v1013
          %1046 = vst [vmem:[%s255 + $0x48] sm:$0xf] %v1014
          %1047 = vst [vmem:[%s255 + $0x4c] sm:$0xf] %v1015
          %1048 = vst [vmem:[%s255 + $0x50] sm:$0xf] %v1016
          %1049 = vst [vmem:[%s255 + $0x54] sm:$0xf] %v1017
          %1050 = vst [vmem:[%s255 + $0x58] sm:$0xf] %v1018
          %1051 = vst [vmem:[%s255 + $0x5c] sm:$0xf] %v1019
          %1052 = vst [vmem:[%s255 + $0x60] sm:$0xf] %v1020
          %1053 = vst [vmem:[%s255 + $0x64] sm:$0xf] %v1021
          %1054 = vst [vmem:[%s255 + $0x68] sm:$0xf] %v1022
          %1055 = vst [vmem:[%s255 + $0x6c] sm:$0xf] %v1023
          %1056 = vst [vmem:[%s255 + $0x70] sm:$0xf] %v1024
          %1057 = vst [vmem:[%s255 + $0x74] sm:$0xf] %v1025
          %1058 = vst [vmem:[%s255 + $0x78] sm:$0xf] %v1026
          %1059 = vst [vmem:[%s255 + $0x7c] sm:$0xf] %v1027
        $region48: #{tpu_custom_call.1} parent=31 // pred_fallthru
          _
        %s1060 = sand.u32 %s132, 1
        %s1061 = scalar_lea.sflag [#allocation5], %s1060
        %s1062 = sand.u32 %s132, 1
        %s1063 = smul.addr %s1062, 128
        %s1064 = scalar_lea.vmem [#allocation8], %s1063
        // Predicated region
        $region49: #{tpu_custom_call.1} parent=31 // pred_check
          %p1065 = pneg %p142
        $region50: #{tpu_custom_call.1} parent=31 // pred_check_branch
          %1067 = sbr.rel (%p1065) target = $region52
        $region51: #{tpu_custom_call.1} parent=31 // pred_region
          %s1068 = smul.u32 32, %s26
          %1070 = vsyncadd %s1061, 0
          %s1071 = sadd.s32 %s27, %s1068
          %s1072 = smul.addr %s1071, 4
          %s1073 = scalar_lea.hbm %s3, %s1072
          %s1074 = sshll.u32 %s1064, 4
          %s1075 = int_to_ptr.vmem [resolvable:$true] %s1074
          %s1076 = sshll.u32 %s1073, 4
          %s1077 = int_to_ptr.hbm [resolvable:$true] %s1076
          %1082 = dma.vmem_to_hbm [thread:$0]  %s1075, 2048, %s1077, %s1061, 64, 64, 4
        $region52: #{tpu_custom_call.1} parent=31 // pred_fallthru
          _
      $region32: #{tpu_custom_call.1} parent=5 // pred_fallthru
        _
      %p1083 = scmp.le.s32.totalorder 2, %s16
      // Predicated region
      $region53: #{tpu_custom_call.1} parent=5 // pred_check
        %p1084 = pneg %p1083
      $region54: #{tpu_custom_call.1} parent=5 // pred_check_branch
        %1086 = sbr.rel (%p1084) target = $region56
      $region55: #{tpu_custom_call.1} parent=5 // pred_region
        %s1087 = ssub.s32 %s16, 2
        // Predicated region
        $region57: #{tpu_custom_call.1} parent=55 // pred_check
          %p1088 = pneg %p148
        $region58: #{tpu_custom_call.1} parent=55 // pred_check_branch
          %1090 = sbr.rel (%p1088) target = $region60
        $region59: #{tpu_custom_call.1} parent=55 // pred_region
          %s1091 = sand.u32 %s133, 1
          %s1092 = scalar_lea.sflag [#allocation5], %s1091
          %s1093 = sand.u32 %s133, 1
          %s1094 = smul.addr %s1093, 128
          %s1095 = scalar_lea.vmem [#allocation8], %s1094
          %1097 = dma.done %s1092, 2048
        $region60: #{tpu_custom_call.1} parent=55 // pred_fallthru
          _
      $region56: #{tpu_custom_call.1} parent=5 // pred_fallthru
        _
    $region6: #{tpu_custom_call.1} parent=1 // loop_footer
      %s20 = sadd.s32 1, %s16
    $region7: #{tpu_custom_call.1} parent=1 // loop_footer_branch
      %15 = sbr.rel target = $region3
    $region8: #{tpu_custom_call.1} parent=1 // loop_exit
      _
    %1098 = vsyncpa [#allocation4], 1
    %s1099 = scalar_lea.sflag [#allocation4], 1
    %1100 = vsyncpa %s1099, 1
    %1101 = vsyncpa [#allocation7], 1
    %1102 = vsyncpa [#allocation5], 1
    %s1103 = scalar_lea.sflag [#allocation5], 1
    %1104 = vsyncpa %s1103, 1

</llo_original>
